<compile_context>
chip_gen: v6e
topology: v6e:2x2x1
jax: 0.10.0
libtpu: 0.0.40
codegen_flags: <defaults>
</compile_context>

<pallas_src>
import jax
import jax.numpy as jnp
from jax.experimental import pallas as pl
from jax.experimental.pallas import tpu as pltpu

MIDDLE = 256       # hidden width of the torch module
HEAD_PAD = 128     # lane-dense padding for the 3 fused heads
MAX_TM = 512       # batch tile (safe for v5e's 16 MiB default scoped VMEM)


def _round_up(n, m):
    return ((n + m - 1) // m) * m


def _onehot_predictor_kernel(x_ref, w1_ref, b1_ref, w2_ref, b2_ref, wh_ref, bh_ref,
                             out_ref):
    # x_ref:  (TM, IN)          w1_ref: (IN, 256) f32    b1_ref: (1, 256) f32
    # w2_ref: (256, 256) bf16   b2_ref: (1, 256) f32
    # wh_ref: (256, 128) bf16   bh_ref: (1, 128) f32     out_ref: (TM, 128) f32
    x = x_ref[...]

    # Layer 1: Linear(input_size -> 256) + ReLU.  K is small; keep it f32.
    h1 = jnp.dot(x, w1_ref[...], preferred_element_type=jnp.float32) + b1_ref[...]
    h1 = jnp.maximum(h1, 0.0)

    # Layer 2: Linear(256 -> 256) + ReLU.  bf16 operands, f32 accumulation (MXU).
    h2 = jnp.dot(h1.astype(jnp.bfloat16), w2_ref[...],
                 preferred_element_type=jnp.float32) + b2_ref[...]
    h2 = jnp.maximum(h2, 0.0)

    # Fused heads: Linear(256 -> 128).  Lanes [0,1,2] = [a, b, c], rest zero pad.
    out = jnp.dot(h2.astype(jnp.bfloat16), wh_ref[...],
                  preferred_element_type=jnp.float32) + bh_ref[...]
    out_ref[...] = out.astype(out_ref.dtype)


def onehot_predictor(x, kernel_params):
    """Forward pass. x: (B, input_size) float32. Returns (a, b, c, d)."""
    w1, b1r, w2b, b2r, whb, bhr, d = kernel_params
    B, input_size = x.shape

    # Batch tile: at most MAX_TM rows, at least the (sublane-rounded) batch itself.
    tm = min(MAX_TM, _round_up(max(B, 1), 8))
    grid = (pl.cdiv(B, tm),)

    out = pl.pallas_call(
        _onehot_predictor_kernel,
        out_shape=jax.ShapeDtypeStruct((B, HEAD_PAD), jnp.float32),
        grid_spec=pl.GridSpec(
            grid=grid,
            in_specs=[
                # batch-tiled input; rows are independent so any padded rows in a
                # partial last block only produce garbage rows we never read back.
                pl.BlockSpec((tm, input_size), lambda i: (i, 0)),
                # weights / biases: constant block index -> resident after 1st fetch
                pl.BlockSpec((input_size, MIDDLE), lambda i: (0, 0)),
                pl.BlockSpec((1, MIDDLE), lambda i: (0, 0)),
                pl.BlockSpec((MIDDLE, MIDDLE), lambda i: (0, 0)),
                pl.BlockSpec((1, MIDDLE), lambda i: (0, 0)),
                pl.BlockSpec((MIDDLE, HEAD_PAD), lambda i: (0, 0)),
                pl.BlockSpec((1, HEAD_PAD), lambda i: (0, 0)),
            ],
            out_specs=pl.BlockSpec((tm, HEAD_PAD), lambda i: (i, 0)),
        ),
        compiler_params=pltpu.CompilerParams(
            dimension_semantics=("parallel",)),
    )(x, w1, b1r, w2b, b2r, whb, bhr)

    a = out[:, 0:1]
    b = out[:, 1:2]
    c = out[:, 2:3]
    return a, b, c, d


def prepare_kernel_params(params):
    """One-time prep: fuse + pad heads, reshape biases, cast big weights to bf16."""
    w1, b1, w2, b2, wa, ba, wb, bb, wc, bc, d = params

    wh = jnp.concatenate([wa, wb, wc], axis=1)            # (256, 3)
    bh = jnp.concatenate([ba, bb, bc], axis=0)            # (3,)
    wh_pad = jnp.zeros((MIDDLE, HEAD_PAD), jnp.float32).at[:, :3].set(wh)
    bh_pad = jnp.zeros((HEAD_PAD,), jnp.float32).at[:3].set(bh)

    return (
        w1,                              # (IN, 256) f32
        b1[None, :],                     # (1, 256) f32
        w2.astype(jnp.bfloat16),         # (256, 256) bf16
        b2[None, :],                     # (1, 256) f32
        wh_pad.astype(jnp.bfloat16),     # (256, 128) bf16
        bh_pad[None, :],                 # (1, 128) f32
        d,                               # (1,) f32 (passed through)
    )


def init_params(key, input_size):
    """Deterministic init matching the torch module's shapes (weights as (in, out))."""
    ks = jax.random.split(key, 11)

    def lin(kw, kb, fan_in, fan_out):
        bound = 1.0 / jnp.sqrt(fan_in)
        w = jax.random.uniform(kw, (fan_in, fan_out), jnp.float32, -bound, bound)
        b = jax.random.uniform(kb, (fan_out,), jnp.float32, -bound, bound)
        return w, b

    w1, b1 = lin(ks[0], ks[1], input_size, MIDDLE)
    w2, b2 = lin(ks[2], ks[3], MIDDLE, MIDDLE)
    wa, ba = lin(ks[4], ks[5], MIDDLE, 1)
    wb, bb = lin(ks[6], ks[7], MIDDLE, 1)
    wc, bc = lin(ks[8], ks[9], MIDDLE, 1)
    d = jax.random.uniform(ks[10], (1,), jnp.float32, 0.0, 1.0)  # torch.rand(1)
    return (w1, b1, w2, b2, wa, ba, wb, bb, wc, bc, d)


def _reference_forward(x, params):
    """Pure-JAX f32 reference of the torch forward."""
    w1, b1, w2, b2, wa, ba, wb, bb, wc, bc, d = params
    v = jnp.maximum(x @ w1 + b1, 0.0)
    v = jnp.maximum(v @ w2 + b2, 0.0)
    return v @ wa + ba, v @ wb + bb, v @ wc + bc, d


if __name__ == "__main__":
    key = jax.random.PRNGKey(0)
    pkey, xkey = jax.random.split(key)

    INPUT_SIZE = 32
    B = 16

    params = init_params(pkey, INPUT_SIZE)
    kparams = prepare_kernel_params(params)

    # one-hot inputs, as the module name implies
    idx = jax.random.randint(xkey, (B,), 0, INPUT_SIZE)
    x = jax.nn.one_hot(idx, INPUT_SIZE, dtype=jnp.float32)

    a, b, c, d = onehot_predictor(x, kparams)
    jax.block_until_ready((a, b, c, d))

    # sanity check against the pure-JAX f32 reference (bf16 matmul operands -> loose tol)
    ra, rb, rc, rd = _reference_forward(x, params)
    assert a.shape == (B, 1) and b.shape == (B, 1) and c.shape == (B, 1) and d.shape == (1,)
    assert jnp.allclose(a, ra, atol=2e-2), "head a mismatch"
    assert jnp.allclose(b, rb, atol=2e-2), "head b mismatch"
    assert jnp.allclose(c, rc, atol=2e-2), "head c mismatch"
    assert jnp.allclose(d, rd), "net_d mismatch"

    print("KERNEL_OK")
</pallas_src>

<mosaic_0001>
module attributes {stable_mosaic.version = 11 : i64} {
  func.func @_onehot_predictor_kernel(%arg0: i32, %arg1: memref<16x32xf32, #tpu.memory_space<vmem>>, %arg2: memref<32x256xf32, #tpu.memory_space<vmem>>, %arg3: memref<1x256xf32, #tpu.memory_space<vmem>>, %arg4: memref<256x256xbf16, #tpu.memory_space<vmem>>, %arg5: memref<1x256xf32, #tpu.memory_space<vmem>>, %arg6: memref<256x128xbf16, #tpu.memory_space<vmem>>, %arg7: memref<1x128xf32, #tpu.memory_space<vmem>>, %arg8: memref<16x128xf32, #tpu.memory_space<vmem>>) attributes {dimension_semantics = [#tpu.dimension_semantics<parallel>], iteration_bounds = array<i64: 1>, scalar_prefetch = 0 : i64, scratch_operands = 0 : i64, tpu.core_type = #tpu.core_type<tc>, window_params = [{transform_indices = @transform_0, window_bounds = array<i64: 16, 32>}, {pipeline_mode = #tpu.pipeline_mode<synchronous>, transform_indices = @transform_1, window_bounds = array<i64: 32, 256>}, {pipeline_mode = #tpu.pipeline_mode<synchronous>, transform_indices = @transform_2, window_bounds = array<i64: 1, 256>}, {pipeline_mode = #tpu.pipeline_mode<synchronous>, transform_indices = @transform_3, window_bounds = array<i64: 256, 256>}, {pipeline_mode = #tpu.pipeline_mode<synchronous>, transform_indices = @transform_4, window_bounds = array<i64: 1, 256>}, {pipeline_mode = #tpu.pipeline_mode<synchronous>, transform_indices = @transform_5, window_bounds = array<i64: 256, 128>}, {pipeline_mode = #tpu.pipeline_mode<synchronous>, transform_indices = @transform_6, window_bounds = array<i64: 1, 128>}, {transform_indices = @transform_7, window_bounds = array<i64: 16, 128>}]} {
    %c0 = arith.constant 0 : index
    %c0_0 = arith.constant 0 : index
    %0 = vector.load %arg1[%c0, %c0_0] : memref<16x32xf32, #tpu.memory_space<vmem>>, vector<16x32xf32>
    %c0_1 = arith.constant 0 : index
    %c0_2 = arith.constant 0 : index
    %1 = vector.load %arg2[%c0_1, %c0_2] : memref<32x256xf32, #tpu.memory_space<vmem>>, vector<32x256xf32>
    %cst = arith.constant dense<0.000000e+00> : vector<16x256xf32>
    %2 = tpu.matmul %0, %1, %cst {dimension_numbers = #tpu.dot_dimension_numbers<[1], [0], [0], [1], [0, 0, 1, 1], [], []>} : vector<16x32xf32>, vector<32x256xf32>, vector<16x256xf32> -> vector<16x256xf32>
    %c0_3 = arith.constant 0 : index
    %c0_4 = arith.constant 0 : index
    %3 = vector.load %arg3[%c0_3, %c0_4] : memref<1x256xf32, #tpu.memory_space<vmem>>, vector<1x256xf32>
    %4 = vector.broadcast %3 : vector<1x256xf32> to vector<16x256xf32>
    %5 = arith.addf %2, %4 : vector<16x256xf32>
    %cst_5 = arith.constant 0.000000e+00 : f32
    %6 = vector.broadcast %cst_5 : f32 to vector<16x256xf32>
    %7 = arith.maximumf %5, %6 : vector<16x256xf32>
    %8 = arith.truncf %7 : vector<16x256xf32> to vector<16x256xbf16>
    %c0_6 = arith.constant 0 : index
    %c0_7 = arith.constant 0 : index
    %9 = vector.load %arg4[%c0_6, %c0_7] : memref<256x256xbf16, #tpu.memory_space<vmem>>, vector<256x256xbf16>
    %cst_8 = arith.constant dense<0.000000e+00> : vector<16x256xf32>
    %10 = tpu.matmul %8, %9, %cst_8 {dimension_numbers = #tpu.dot_dimension_numbers<[1], [0], [0], [1], [0, 0, 1, 1], [], []>} : vector<16x256xbf16>, vector<256x256xbf16>, vector<16x256xf32> -> vector<16x256xf32>
    %c0_9 = arith.constant 0 : index
    %c0_10 = arith.constant 0 : index
    %11 = vector.load %arg5[%c0_9, %c0_10] : memref<1x256xf32, #tpu.memory_space<vmem>>, vector<1x256xf32>
    %12 = vector.broadcast %11 : vector<1x256xf32> to vector<16x256xf32>
    %13 = arith.addf %10, %12 : vector<16x256xf32>
    %cst_11 = arith.constant 0.000000e+00 : f32
    %14 = vector.broadcast %cst_11 : f32 to vector<16x256xf32>
    %15 = arith.maximumf %13, %14 : vector<16x256xf32>
    %16 = arith.truncf %15 : vector<16x256xf32> to vector<16x256xbf16>
    %c0_12 = arith.constant 0 : index
    %c0_13 = arith.constant 0 : index
    %17 = vector.load %arg6[%c0_12, %c0_13] : memref<256x128xbf16, #tpu.memory_space<vmem>>, vector<256x128xbf16>
    %cst_14 = arith.constant dense<0.000000e+00> : vector<16x128xf32>
    %18 = tpu.matmul %16, %17, %cst_14 {dimension_numbers = #tpu.dot_dimension_numbers<[1], [0], [0], [1], [0, 0, 1, 1], [], []>} : vector<16x256xbf16>, vector<256x128xbf16>, vector<16x128xf32> -> vector<16x128xf32>
    %c0_15 = arith.constant 0 : index
    %c0_16 = arith.constant 0 : index
    %19 = vector.load %arg7[%c0_15, %c0_16] : memref<1x128xf32, #tpu.memory_space<vmem>>, vector<1x128xf32>
    %20 = vector.broadcast %19 : vector<1x128xf32> to vector<16x128xf32>
    %21 = arith.addf %18, %20 : vector<16x128xf32>
    %c0_17 = arith.constant 0 : index
    %c0_18 = arith.constant 0 : index
    %22 = vector.load %arg8[%c0_17, %c0_18] : memref<16x128xf32, #tpu.memory_space<vmem>>, vector<16x128xf32>
    tpu.vector_store %arg8[%c0_17, %c0_18], %21 {strides = array<i32>} : memref<16x128xf32, #tpu.memory_space<vmem>>, vector<16x128xf32>,
    return
  }
  func.func @transform_0(%arg0: i32) -> (i32, i32) {
    %c0_i32 = arith.constant 0 : i32
    %c0_i32_0 = arith.constant 0 : i32
    return %arg0, %c0_i32 : i32, i32
  }
  func.func @transform_1(%arg0: i32) -> (i32, i32) {
    %c0_i32 = arith.constant 0 : i32
    %c0_i32_0 = arith.constant 0 : i32
    %c0_i32_1 = arith.constant 0 : i32
    return %c0_i32, %c0_i32_0 : i32, i32
  }
  func.func @transform_2(%arg0: i32) -> (i32, i32) {
    %c0_i32 = arith.constant 0 : i32
    %c0_i32_0 = arith.constant 0 : i32
    %c0_i32_1 = arith.constant 0 : i32
    return %c0_i32, %c0_i32_0 : i32, i32
  }
  func.func @transform_3(%arg0: i32) -> (i32, i32) {
    %c0_i32 = arith.constant 0 : i32
    %c0_i32_0 = arith.constant 0 : i32
    %c0_i32_1 = arith.constant 0 : i32
    return %c0_i32, %c0_i32_0 : i32, i32
  }
  func.func @transform_4(%arg0: i32) -> (i32, i32) {
    %c0_i32 = arith.constant 0 : i32
    %c0_i32_0 = arith.constant 0 : i32
    %c0_i32_1 = arith.constant 0 : i32
    return %c0_i32, %c0_i32_0 : i32, i32
  }
  func.func @transform_5(%arg0: i32) -> (i32, i32) {
    %c0_i32 = arith.constant 0 : i32
    %c0_i32_0 = arith.constant 0 : i32
    %c0_i32_1 = arith.constant 0 : i32
    return %c0_i32, %c0_i32_0 : i32, i32
  }
  func.func @transform_6(%arg0: i32) -> (i32, i32) {
    %c0_i32 = arith.constant 0 : i32
    %c0_i32_0 = arith.constant 0 : i32
    %c0_i32_1 = arith.constant 0 : i32
    return %c0_i32, %c0_i32_0 : i32, i32
  }
  func.func @transform_7(%arg0: i32) -> (i32, i32) {
    %c0_i32 = arith.constant 0 : i32
    %c0_i32_0 = arith.constant 0 : i32
    return %arg0, %c0_i32 : i32, i32
  }
}

</mosaic_0001>

<llo_original>
// kernel: tpu_custom_call.1
$region0: #{tpu_custom_call.1}
  #allocation0 [shape = 'u32[]', space=smem, size = 0x4, offset = 0x4, fixed_abs, tag = 'smem constant byte address 0x4 - core index']
  #allocation1 [shape = 'u32[144,128]{1,0:T(1,128)}', space=vmem, size = 0x12000, scoped, tag = 'internal scratch']
  %s0 = inlined_call_operand.hbm [shape: f32[16,32], index: 0, kind: input, shape index: {}]
  %s1 = inlined_call_operand.hbm [shape: f32[32,256], index: 1, kind: input, shape index: {}]
  %s2 = inlined_call_operand.vmem [shape: f32[1,256], index: 2, kind: input, shape index: {}]
  %s3 = inlined_call_operand.hbm [shape: bf16[256,256], index: 3, kind: input, shape index: {}]
  %s4 = inlined_call_operand.vmem [shape: f32[1,256], index: 4, kind: input, shape index: {}]
  %s5 = inlined_call_operand.hbm [shape: bf16[256,128], index: 5, kind: input, shape index: {}]
  %s6 = inlined_call_operand.vmem [shape: f32[1,128], index: 6, kind: input, shape index: {}]
  %s7 = inlined_call_operand.hbm [shape: f32[16,128], index: 7, kind: output, shape index: {}]
  %s8 = sld [smem:[#allocation0]]
  $region54: #{tpu_custom_call.1} parent=0
    _
  %s10 = ssub.s32 1, %s8
  %s11 = scalar_select 0, %s10, %s8
  $region1: #{tpu_custom_call.1} parent=0
    #allocation2 [shape = 'u8[8192]{0}', space=vmem, size = 0x2000, scoped, tag = 'input window, operand 0, single buffered']
    #allocation3 [shape = 's32[1]{0}', space=sflag, size = 0x4, scoped, tag = 'scoped memory for tpu_custom_call.1']
    #allocation4 [shape = 's32[1]{0}', space=sflag, size = 0x4, scoped, tag = 'scoped memory for tpu_custom_call.1']
    #allocation5 [shape = 'u8[32768]{0}', space=vmem, size = 0x8000, scoped, tag = 'input window, operand 1, single buffered']
    #allocation6 [shape = 's32[1]{0}', space=sflag, size = 0x4, scoped, tag = 'scoped memory for tpu_custom_call.1']
    #allocation7 [shape = 'u8[131072]{0}', space=vmem, size = 0x20000, scoped, tag = 'input window, operand 3, single buffered']
    #allocation8 [shape = 'u8[65536]{0}', space=vmem, size = 0x10000, scoped, tag = 'input window, operand 5, single buffered']
    #allocation9 [shape = 's32[1]{0}', space=sflag, size = 0x4, scoped, tag = 'scoped memory for tpu_custom_call.1']
    #allocation10 [shape = 'u8[8192]{0}', space=vmem, size = 0x2000, scoped, tag = 'output window, operand 0, single buffered']
    %12 = vsyncpa [#allocation3], 0
    %13 = vsyncpa [#allocation6], 0
    %14 = vsyncpa [#allocation9], 0
    %15 = vsyncpa [#allocation4], 0
    // Predicated region
    $region2: #{tpu_custom_call.1} parent=1 // pred_check
      _
    $region3: #{tpu_custom_call.1} parent=1 // pred_check_branch
      %17 = sbr.rel (0) target = $region5
    $region4: #{tpu_custom_call.1} parent=1 // pred_region
      %s19 = ssub.s32 256, 256
      %20 = vsyncadd [#allocation3], %s19
      %s21 = sshll.u32 [#allocation2], 4
      %s22 = int_to_ptr.vmem [resolvable:$true] %s21
      %27 = dma.hbm_to_vmem [thread:$0]  %s0, 256, %s22, [#allocation3], 128, 128, 8
    $region5: #{tpu_custom_call.1} parent=1 // pred_fallthru
      _
    // Predicated region
    $region6: #{tpu_custom_call.1} parent=1 // pred_check
      _
    $region7: #{tpu_custom_call.1} parent=1 // pred_check_branch
      %29 = sbr.rel (0) target = $region9
    $region8: #{tpu_custom_call.1} parent=1 // pred_region
      %s31 = ssub.s32 1024, 1024
      %32 = vsyncadd [#allocation6], %s31
      %s33 = sshll.u32 [#allocation5], 4
      %s34 = int_to_ptr.vmem [resolvable:$true] %s33
      %39 = dma.hbm_to_vmem [thread:$0]  %s1, 1024, %s34, [#allocation6], 256, 256, 16
    $region9: #{tpu_custom_call.1} parent=1 // pred_fallthru
      _
    // Predicated region
    $region10: #{tpu_custom_call.1} parent=1 // pred_check
      _
    $region11: #{tpu_custom_call.1} parent=1 // pred_check_branch
      %41 = sbr.rel (0) target = $region13
    $region12: #{tpu_custom_call.1} parent=1 // pred_region
      _
    $region13: #{tpu_custom_call.1} parent=1 // pred_fallthru
      _
    // Predicated region
    $region14: #{tpu_custom_call.1} parent=1 // pred_check
      _
    $region15: #{tpu_custom_call.1} parent=1 // pred_check_branch
      %43 = sbr.rel (0) target = $region17
    $region16: #{tpu_custom_call.1} parent=1 // pred_region
      %s45 = ssub.s32 4096, 4096
      %46 = vsyncadd [#allocation6], %s45
      %s47 = sshll.u32 [#allocation7], 4
      %s48 = int_to_ptr.vmem [resolvable:$true] %s47
      %53 = dma.hbm_to_vmem [thread:$0]  %s3, 4096, %s48, [#allocation6], 128, 128, 8
    $region17: #{tpu_custom_call.1} parent=1 // pred_fallthru
      _
    // Predicated region
    $region18: #{tpu_custom_call.1} parent=1 // pred_check
      _
    $region19: #{tpu_custom_call.1} parent=1 // pred_check_branch
      %55 = sbr.rel (0) target = $region21
    $region20: #{tpu_custom_call.1} parent=1 // pred_region
      _
    $region21: #{tpu_custom_call.1} parent=1 // pred_fallthru
      _
    // Predicated region
    $region22: #{tpu_custom_call.1} parent=1 // pred_check
      _
    $region23: #{tpu_custom_call.1} parent=1 // pred_check_branch
      %57 = sbr.rel (0) target = $region25
    $region24: #{tpu_custom_call.1} parent=1 // pred_region
      %s59 = ssub.s32 2048, 2048
      %60 = vsyncadd [#allocation9], %s59
      %s61 = sshll.u32 [#allocation8], 4
      %s62 = int_to_ptr.vmem [resolvable:$true] %s61
      %67 = dma.hbm_to_vmem [thread:$0]  %s5, 2048, %s62, [#allocation9], 64, 64, 4
    $region25: #{tpu_custom_call.1} parent=1 // pred_fallthru
      _
    // Predicated region
    $region26: #{tpu_custom_call.1} parent=1 // pred_check
      _
    $region27: #{tpu_custom_call.1} parent=1 // pred_check_branch
      %69 = sbr.rel (0) target = $region29
    $region28: #{tpu_custom_call.1} parent=1 // pred_region
      _
    $region29: #{tpu_custom_call.1} parent=1 // pred_fallthru
      _
    // Predicated region
    $region30: #{tpu_custom_call.1} parent=1 // pred_check
      _
    $region31: #{tpu_custom_call.1} parent=1 // pred_check_branch
      %71 = sbr.rel (0) target = $region33
    $region32: #{tpu_custom_call.1} parent=1 // pred_region
      %72 = dma.done [#allocation3], 256
    $region33: #{tpu_custom_call.1} parent=1 // pred_fallthru
      _
    // Predicated region
    $region34: #{tpu_custom_call.1} parent=1 // pred_check
      _
    $region35: #{tpu_custom_call.1} parent=1 // pred_check_branch
      %74 = sbr.rel (0) target = $region37
    $region36: #{tpu_custom_call.1} parent=1 // pred_region
      %75 = dma.done [#allocation6], 1024
    $region37: #{tpu_custom_call.1} parent=1 // pred_fallthru
      _
    // Predicated region
    $region38: #{tpu_custom_call.1} parent=1 // pred_check
      _
    $region39: #{tpu_custom_call.1} parent=1 // pred_check_branch
      %77 = sbr.rel (0) target = $region41
    $region40: #{tpu_custom_call.1} parent=1 // pred_region
      %78 = dma.done [#allocation6], 4096
    $region41: #{tpu_custom_call.1} parent=1 // pred_fallthru
      _
    // Predicated region
    $region42: #{tpu_custom_call.1} parent=1 // pred_check
      _
    $region43: #{tpu_custom_call.1} parent=1 // pred_check_branch
      %80 = sbr.rel (0) target = $region45
    $region44: #{tpu_custom_call.1} parent=1 // pred_region
      %81 = dma.done [#allocation9], 2048
    $region45: #{tpu_custom_call.1} parent=1 // pred_fallthru
      _
    %v83 = vld [vmem:[#allocation2] sm:$0xff]
    %v84 = vld [vmem:[#allocation2 + $0x8] sm:$0xff]
    %v85 = vld [vmem:[#allocation5] sm:$0xff]
    %v86 = vld [vmem:[#allocation5 + $0x8] sm:$0xff]
    %v87 = vld [vmem:[#allocation5 + $0x10] sm:$0xff]
    %v88 = vld [vmem:[#allocation5 + $0x18] sm:$0xff]
    %v89 = vld [vmem:[#allocation5 + $0x20] sm:$0xff]
    %v90 = vld [vmem:[#allocation5 + $0x28] sm:$0xff]
    %v91 = vld [vmem:[#allocation5 + $0x30] sm:$0xff]
    %v92 = vld [vmem:[#allocation5 + $0x38] sm:$0xff]
    %v93 = vld [vmem:[%s2] sm:$0x3]
    %v95 = vlaneseq
    %v96 = vshrl.u32 %v95, 7
    %v97 = vsub.s32 0, %v96
    %v98 = vrot.slane %v93, %v97
    %v99 = vlaneseq
    %v100 = vshrl.u32 %v99, 7
    %v101 = vsub.s32 1, %v100
    %v102 = vrot.slane %v93, %v101
    %vm105 = vcmask 261120
    %v107 = vsel %vm105, %v83, 0
    %v110 = vsel %vm105, %v84, 0
    %112 = vmatprep.subr.mxu0 0.0
    %113 = vmatpush1.msra.mxu0 0.0
    %114 = vmatprep.subr.mxu0 0.0
    %115 = vmatpush1.msra.mxu0 0.0
    %116 = vmatprep.subr.mxu0 0.0
    %117 = vmatpush1.msra.mxu0 0.0
    %118 = vmatprep.subr.mxu0 0.0
    %119 = vmatpush1.msra.mxu0 0.0
    %120 = vmatprep.subr.mxu0 0.0
    %121 = vmatpush1.msra.mxu0 0.0
    %122 = vmatprep.subr.mxu0 0.0
    %123 = vmatpush1.msra.mxu0 0.0
    %124 = vmatprep.subr.mxu0 0.0
    %125 = vmatpush1.msra.mxu0 0.0
    %126 = vmatprep.subr.mxu0 0.0
    %127 = vmatpush1.msra.mxu0 0.0
    %128 = vmatprep.subr.mxu0 0.0
    %129 = vmatpush1.msra.mxu0 0.0
    %130 = vmatprep.subr.mxu0 0.0
    %131 = vmatpush1.msra.mxu0 0.0
    %132 = vmatprep.subr.mxu0 0.0
    %133 = vmatpush1.msra.mxu0 0.0
    %134 = vmatprep.subr.mxu0 0.0
    %135 = vmatpush1.msra.mxu0 0.0
    %136 = vmatprep.subr.mxu0 %v92
    %137 = vmatpush1.msra.mxu0 %v91
    %138 = vmatprep.subr.mxu0 %v90
    %139 = vmatpush1.msra.mxu0 %v89
    %140 = vmatprep.subr.mxu0 %v88
    %141 = vmatpush1.msra.mxu0 %v87
    %142 = vmatprep.subr.mxu0 %v86
    %143 = vmatpush1.msra.mxu0 %v85
    %144 = vmatprep.subr.mxu0 0.0
    %145 = vmatpush2.msra.mxu0 0.0
    %146 = vmatprep.subr.mxu0 0.0
    %147 = vmatpush2.msra.mxu0 0.0
    %148 = vmatprep.subr.mxu0 0.0
    %149 = vmatpush2.msra.mxu0 0.0
    %150 = vmatprep.subr.mxu0 0.0
    %151 = vmatpush2.msra.mxu0 0.0
    %152 = vmatprep.subr.mxu0 0.0
    %153 = vmatpush2.msra.mxu0 0.0
    %154 = vmatprep.subr.mxu0 0.0
    %155 = vmatpush2.msra.mxu0 0.0
    %156 = vmatprep.subr.mxu0 0.0
    %157 = vmatpush2.msra.mxu0 0.0
    %158 = vmatprep.subr.mxu0 0.0
    %159 = vmatpush2.msra.mxu0 0.0
    %160 = vmatprep.subr.mxu0 0.0
    %161 = vmatpush2.msra.mxu0 0.0
    %162 = vmatprep.subr.mxu0 0.0
    %163 = vmatpush2.msra.mxu0 0.0
    %164 = vmatprep.subr.mxu0 0.0
    %165 = vmatpush2.msra.mxu0 0.0
    %166 = vmatprep.subr.mxu0 0.0
    %167 = vmatpush2.msra.mxu0 0.0
    %168 = vmatprep.subr.mxu0 0.0
    %169 = vmatpush2.msra.mxu0 0.0
    %170 = vmatprep.subr.mxu0 0.0
    %171 = vmatpush2.msra.mxu0 0.0
    %172 = vmatprep.subr.mxu0 0.0
    %173 = vmatpush2.msra.mxu0 0.0
    %174 = vmatprep.subr.mxu0 0.0
    %175 = vmatpush2.msra.mxu0 0.0
    %176 = vmatprep.mubr.f32.mxu0 0.0
    %177 = vmatmul.mubr.f32.gmra.mxu0 %v107
    %v178 = vpop.f32.mrf.mxu0
    %v179 = vadd.f32 %v98, %v178
    %v180 = vpop.f32.mrf.mxu0
    %v181 = vadd.f32 %v102, %v180
    %182 = vmatprep.mubr.f32.mxu0 0.0
    %183 = vmatmul.mubr.f32.gmra.mxu0 %v110
    %v184 = vpop.f32.mrf.mxu0
    %v185 = vadd.f32 %v98, %v184
    %v186 = vpop.f32.mrf.mxu0
    %v187 = vadd.f32 %v102, %v186
    %188 = vdwg.mxu0
    %v189 = vmax.f32 %v179, 0.0
    %v190 = vmax.f32 %v181, 0.0
    %v191 = vmax.f32 %v185, 0.0
    %v192 = vmax.f32 %v187, 0.0
    %v193 = vpack.c.bf16 %v191, %v189
    %v194 = vpack.c.bf16 %v192, %v190
    %v195 = vld [vmem:[#allocation7] sm:$0xff]
    %v196 = vld [vmem:[#allocation7 + $0x8] sm:$0xff]
    %v197 = vld [vmem:[#allocation7 + $0x10] sm:$0xff]
    %v198 = vld [vmem:[#allocation7 + $0x18] sm:$0xff]
    %v199 = vld [vmem:[#allocation7 + $0x20] sm:$0xff]
    %v200 = vld [vmem:[#allocation7 + $0x28] sm:$0xff]
    %v201 = vld [vmem:[#allocation7 + $0x30] sm:$0xff]
    %v202 = vld [vmem:[#allocation7 + $0x38] sm:$0xff]
    %v203 = vld [vmem:[#allocation7 + $0x40] sm:$0xff]
    %v204 = vld [vmem:[#allocation7 + $0x48] sm:$0xff]
    %v205 = vld [vmem:[#allocation7 + $0x50] sm:$0xff]
    %v206 = vld [vmem:[#allocation7 + $0x58] sm:$0xff]
    %v207 = vld [vmem:[#allocation7 + $0x60] sm:$0xff]
    %v208 = vld [vmem:[#allocation7 + $0x68] sm:$0xff]
    %v209 = vld [vmem:[#allocation7 + $0x70] sm:$0xff]
    %v210 = vld [vmem:[#allocation7 + $0x78] sm:$0xff]
    %v211 = vld [vmem:[#allocation7 + $0x80] sm:$0xff]
    %v212 = vld [vmem:[#allocation7 + $0x88] sm:$0xff]
    %v213 = vld [vmem:[#allocation7 + $0x90] sm:$0xff]
    %v214 = vld [vmem:[#allocation7 + $0x98] sm:$0xff]
    %v215 = vld [vmem:[#allocation7 + $0xa0] sm:$0xff]
    %v216 = vld [vmem:[#allocation7 + $0xa8] sm:$0xff]
    %v217 = vld [vmem:[#allocation7 + $0xb0] sm:$0xff]
    %v218 = vld [vmem:[#allocation7 + $0xb8] sm:$0xff]
    %v219 = vld [vmem:[#allocation7 + $0xc0] sm:$0xff]
    %v220 = vld [vmem:[#allocation7 + $0xc8] sm:$0xff]
    %v221 = vld [vmem:[#allocation7 + $0xd0] sm:$0xff]
    %v222 = vld [vmem:[#allocation7 + $0xd8] sm:$0xff]
    %v223 = vld [vmem:[#allocation7 + $0xe0] sm:$0xff]
    %v224 = vld [vmem:[#allocation7 + $0xe8] sm:$0xff]
    %v225 = vld [vmem:[#allocation7 + $0xf0] sm:$0xff]
    %v226 = vld [vmem:[#allocation7 + $0xf8] sm:$0xff]
    %v227 = vld [vmem:[%s4] sm:$0x3]
    %v229 = vlaneseq
    %v230 = vshrl.u32 %v229, 7
    %v231 = vsub.s32 0, %v230
    %v232 = vrot.slane %v227, %v231
    %v233 = vlaneseq
    %v234 = vshrl.u32 %v233, 7
    %v235 = vsub.s32 1, %v234
    %v236 = vrot.slane %v227, %v235
    %v271 = vunpack.c.l.b16 %v195
    %v272 = vunpack.c.h.b16 %v195
    %v273 = vunpack.c.l.b16 %v196
    %v274 = vunpack.c.h.b16 %v196
    %v275 = vunpack.c.l.b16 %v197
    %v276 = vunpack.c.h.b16 %v197
    %v277 = vunpack.c.l.b16 %v198
    %v278 = vunpack.c.h.b16 %v198
    %v279 = vunpack.c.l.b16 %v199
    %v280 = vunpack.c.h.b16 %v199
    %v281 = vunpack.c.l.b16 %v200
    %v282 = vunpack.c.h.b16 %v200
    %v283 = vunpack.c.l.b16 %v201
    %v284 = vunpack.c.h.b16 %v201
    %v285 = vunpack.c.l.b16 %v202
    %v286 = vunpack.c.h.b16 %v202
    %v287 = vunpack.c.l.b16 %v203
    %v288 = vunpack.c.h.b16 %v203
    %v289 = vunpack.c.l.b16 %v204
    %v290 = vunpack.c.h.b16 %v204
    %v291 = vunpack.c.l.b16 %v205
    %v292 = vunpack.c.h.b16 %v205
    %v293 = vunpack.c.l.b16 %v206
    %v294 = vunpack.c.h.b16 %v206
    %v295 = vunpack.c.l.b16 %v207
    %v296 = vunpack.c.h.b16 %v207
    %v297 = vunpack.c.l.b16 %v208
    %v298 = vunpack.c.h.b16 %v208
    %v299 = vunpack.c.l.b16 %v209
    %v300 = vunpack.c.h.b16 %v209
    %v301 = vunpack.c.l.b16 %v210
    %v302 = vunpack.c.h.b16 %v210
    %v303 = vunpack.c.l.b16 %v211
    %v304 = vunpack.c.h.b16 %v211
    %v305 = vunpack.c.l.b16 %v212
    %v306 = vunpack.c.h.b16 %v212
    %v307 = vunpack.c.l.b16 %v213
    %v308 = vunpack.c.h.b16 %v213
    %v309 = vunpack.c.l.b16 %v214
    %v310 = vunpack.c.h.b16 %v214
    %v311 = vunpack.c.l.b16 %v215
    %v312 = vunpack.c.h.b16 %v215
    %v313 = vunpack.c.l.b16 %v216
    %v314 = vunpack.c.h.b16 %v216
    %v315 = vunpack.c.l.b16 %v217
    %v316 = vunpack.c.h.b16 %v217
    %v317 = vunpack.c.l.b16 %v218
    %v318 = vunpack.c.h.b16 %v218
    %v319 = vunpack.c.l.b16 %v219
    %v320 = vunpack.c.h.b16 %v219
    %v321 = vunpack.c.l.b16 %v220
    %v322 = vunpack.c.h.b16 %v220
    %v323 = vunpack.c.l.b16 %v221
    %v324 = vunpack.c.h.b16 %v221
    %v325 = vunpack.c.l.b16 %v222
    %v326 = vunpack.c.h.b16 %v222
    %v327 = vunpack.c.l.b16 %v223
    %v328 = vunpack.c.h.b16 %v223
    %v329 = vunpack.c.l.b16 %v224
    %v330 = vunpack.c.h.b16 %v224
    %v331 = vunpack.c.l.b16 %v225
    %v332 = vunpack.c.h.b16 %v225
    %v333 = vunpack.c.l.b16 %v226
    %v334 = vunpack.c.h.b16 %v226
    %v335 = vpack.c.b16 %v273, %v271
    %v336 = vpack.c.b16 %v274, %v272
    %v337 = vpack.c.b16 %v277, %v275
    %v338 = vpack.c.b16 %v278, %v276
    %v339 = vpack.c.b16 %v281, %v279
    %v340 = vpack.c.b16 %v282, %v280
    %v341 = vpack.c.b16 %v285, %v283
    %v342 = vpack.c.b16 %v286, %v284
    %v343 = vpack.c.b16 %v289, %v287
    %v344 = vpack.c.b16 %v290, %v288
    %v345 = vpack.c.b16 %v293, %v291
    %v346 = vpack.c.b16 %v294, %v292
    %v347 = vpack.c.b16 %v297, %v295
    %v348 = vpack.c.b16 %v298, %v296
    %v349 = vpack.c.b16 %v301, %v299
    %v350 = vpack.c.b16 %v302, %v300
    %v351 = vpack.c.b16 %v305, %v303
    %v352 = vpack.c.b16 %v306, %v304
    %v353 = vpack.c.b16 %v309, %v307
    %v354 = vpack.c.b16 %v310, %v308
    %v355 = vpack.c.b16 %v313, %v311
    %v356 = vpack.c.b16 %v314, %v312
    %v357 = vpack.c.b16 %v317, %v315
    %v358 = vpack.c.b16 %v318, %v316
    %v359 = vpack.c.b16 %v321, %v319
    %v360 = vpack.c.b16 %v322, %v320
    %v361 = vpack.c.b16 %v325, %v323
    %v362 = vpack.c.b16 %v326, %v324
    %v363 = vpack.c.b16 %v329, %v327
    %v364 = vpack.c.b16 %v330, %v328
    %v365 = vpack.c.b16 %v333, %v331
    %v366 = vpack.c.b16 %v334, %v332
    %399 = vmatprep.subr.bf16.mxu0 %v350
    %400 = vmatpush1.bf16.msra.mxu0 %v349
    %401 = vmatprep.subr.bf16.mxu0 %v348
    %402 = vmatpush1.bf16.msra.mxu0 %v347
    %403 = vmatprep.subr.bf16.mxu0 %v346
    %404 = vmatpush1.bf16.msra.mxu0 %v345
    %405 = vmatprep.subr.bf16.mxu0 %v344
    %406 = vmatpush1.bf16.msra.mxu0 %v343
    %407 = vmatprep.subr.bf16.mxu0 %v342
    %408 = vmatpush1.bf16.msra.mxu0 %v341
    %409 = vmatprep.subr.bf16.mxu0 %v340
    %410 = vmatpush1.bf16.msra.mxu0 %v339
    %411 = vmatprep.subr.bf16.mxu0 %v338
    %412 = vmatpush1.bf16.msra.mxu0 %v337
    %413 = vmatprep.subr.bf16.mxu0 %v336
    %414 = vmatpush1.bf16.msra.mxu0 %v335
    %415 = vmatprep.subr.bf16.mxu0 %v366
    %416 = vmatpush2.bf16.msra.mxu0 %v365
    %417 = vmatprep.subr.bf16.mxu0 %v364
    %418 = vmatpush2.bf16.msra.mxu0 %v363
    %419 = vmatprep.subr.bf16.mxu0 %v362
    %420 = vmatpush2.bf16.msra.mxu0 %v361
    %421 = vmatprep.subr.bf16.mxu0 %v360
    %422 = vmatpush2.bf16.msra.mxu0 %v359
    %423 = vmatprep.subr.bf16.mxu0 %v358
    %424 = vmatpush2.bf16.msra.mxu0 %v357
    %425 = vmatprep.subr.bf16.mxu0 %v356
    %426 = vmatpush2.bf16.msra.mxu0 %v355
    %427 = vmatprep.subr.bf16.mxu0 %v354
    %428 = vmatpush2.bf16.msra.mxu0 %v353
    %429 = vmatprep.subr.bf16.mxu0 %v352
    %430 = vmatpush2.bf16.msra.mxu0 %v351
    %431 = vmatprep.mubr.bf16.mxu0 %v194
    %432 = vmatmul.mubr.bf16.gmra.mxu0 %v193
    %v433 = vpop.f32.mrf.mxu0
    %v434 = vadd.f32 %v232, %v433
    %v435 = vpop.f32.mrf.mxu0
    %v436 = vadd.f32 %v236, %v435
    %v437 = vpop.f32.mrf.mxu0
    %v438 = vadd.f32 %v232, %v437
    %v439 = vpop.f32.mrf.mxu0
    %v440 = vadd.f32 %v236, %v439
    %441 = vdwg.mxu0
    %v442 = vmax.f32 %v434, 0.0
    %v443 = vmax.f32 %v436, 0.0
    %v444 = vmax.f32 %v438, 0.0
    %v445 = vmax.f32 %v440, 0.0
    %v446 = vpack.c.bf16 %v444, %v442
    %v447 = vpack.c.bf16 %v445, %v443
    %v448 = vld [vmem:[#allocation8] sm:$0xf]
    %v449 = vld [vmem:[#allocation8 + $0x4] sm:$0xf]
    %v450 = vld [vmem:[#allocation8 + $0x8] sm:$0xf]
    %v451 = vld [vmem:[#allocation8 + $0xc] sm:$0xf]
    %v452 = vld [vmem:[#allocation8 + $0x10] sm:$0xf]
    %v453 = vld [vmem:[#allocation8 + $0x14] sm:$0xf]
    %v454 = vld [vmem:[#allocation8 + $0x18] sm:$0xf]
    %v455 = vld [vmem:[#allocation8 + $0x1c] sm:$0xf]
    %v456 = vld [vmem:[#allocation8 + $0x20] sm:$0xf]
    %v457 = vld [vmem:[#allocation8 + $0x24] sm:$0xf]
    %v458 = vld [vmem:[#allocation8 + $0x28] sm:$0xf]
    %v459 = vld [vmem:[#allocation8 + $0x2c] sm:$0xf]
    %v460 = vld [vmem:[#allocation8 + $0x30] sm:$0xf]
    %v461 = vld [vmem:[#allocation8 + $0x34] sm:$0xf]
    %v462 = vld [vmem:[#allocation8 + $0x38] sm:$0xf]
    %v463 = vld [vmem:[#allocation8 + $0x3c] sm:$0xf]
    %v464 = vld [vmem:[#allocation8 + $0x40] sm:$0xf]
    %v465 = vld [vmem:[#allocation8 + $0x44] sm:$0xf]
    %v466 = vld [vmem:[#allocation8 + $0x48] sm:$0xf]
    %v467 = vld [vmem:[#allocation8 + $0x4c] sm:$0xf]
    %v468 = vld [vmem:[#allocation8 + $0x50] sm:$0xf]
    %v469 = vld [vmem:[#allocation8 + $0x54] sm:$0xf]
    %v470 = vld [vmem:[#allocation8 + $0x58] sm:$0xf]
    %v471 = vld [vmem:[#allocation8 + $0x5c] sm:$0xf]
    %v472 = vld [vmem:[#allocation8 + $0x60] sm:$0xf]
    %v473 = vld [vmem:[#allocation8 + $0x64] sm:$0xf]
    %v474 = vld [vmem:[#allocation8 + $0x68] sm:$0xf]
    %v475 = vld [vmem:[#allocation8 + $0x6c] sm:$0xf]
    %v476 = vld [vmem:[#allocation8 + $0x70] sm:$0xf]
    %v477 = vld [vmem:[#allocation8 + $0x74] sm:$0xf]
    %v478 = vld [vmem:[#allocation8 + $0x78] sm:$0xf]
    %v479 = vld [vmem:[#allocation8 + $0x7c] sm:$0xf]
    %v480 = vld [vmem:[%s6] sm:$0x1]
    %v482 = vlaneseq
    %v483 = vshrl.u32 %v482, 7
    %v484 = vsub.s32 0, %v483
    %v485 = vrot.slane %v480, %v484
    %v519 = vunpack.c.l.b16 %v448
    %v520 = vunpack.c.l.b16 %v449
    %v521 = vunpack.c.l.b16 %v450
    %v522 = vunpack.c.l.b16 %v451
    %v523 = vunpack.c.l.b16 %v452
    %v524 = vunpack.c.l.b16 %v453
    %v525 = vunpack.c.l.b16 %v454
    %v526 = vunpack.c.l.b16 %v455
    %v527 = vunpack.c.l.b16 %v456
    %v528 = vunpack.c.l.b16 %v457
    %v529 = vunpack.c.l.b16 %v458
    %v530 = vunpack.c.l.b16 %v459
    %v531 = vunpack.c.l.b16 %v460
    %v532 = vunpack.c.l.b16 %v461
    %v533 = vunpack.c.l.b16 %v462
    %v534 = vunpack.c.l.b16 %v463
    %v535 = vunpack.c.l.b16 %v464
    %v536 = vunpack.c.l.b16 %v465
    %v537 = vunpack.c.l.b16 %v466
    %v538 = vunpack.c.l.b16 %v467
    %v539 = vunpack.c.l.b16 %v468
    %v540 = vunpack.c.l.b16 %v469
    %v541 = vunpack.c.l.b16 %v470
    %v542 = vunpack.c.l.b16 %v471
    %v543 = vunpack.c.l.b16 %v472
    %v544 = vunpack.c.l.b16 %v473
    %v545 = vunpack.c.l.b16 %v474
    %v546 = vunpack.c.l.b16 %v475
    %v547 = vunpack.c.l.b16 %v476
    %v548 = vunpack.c.l.b16 %v477
    %v549 = vunpack.c.l.b16 %v478
    %v550 = vunpack.c.l.b16 %v479
    %v551 = vpack.c.b16 %v520, %v519
    %v552 = vpack.c.b16 %v522, %v521
    %v553 = vpack.c.b16 %v524, %v523
    %v554 = vpack.c.b16 %v526, %v525
    %v555 = vpack.c.b16 %v528, %v527
    %v556 = vpack.c.b16 %v530, %v529
    %v557 = vpack.c.b16 %v532, %v531
    %v558 = vpack.c.b16 %v534, %v533
    %v559 = vpack.c.b16 %v536, %v535
    %v560 = vpack.c.b16 %v538, %v537
    %v561 = vpack.c.b16 %v540, %v539
    %v562 = vpack.c.b16 %v542, %v541
    %v563 = vpack.c.b16 %v544, %v543
    %v564 = vpack.c.b16 %v546, %v545
    %v565 = vpack.c.b16 %v548, %v547
    %v566 = vpack.c.b16 %v550, %v549
    %583 = vmatprep.subr.bf16.mxu0 0
    %584 = vmatpush1.bf16.msra.mxu0 %v558
    %585 = vmatprep.subr.bf16.mxu0 0
    %586 = vmatpush1.bf16.msra.mxu0 %v557
    %587 = vmatprep.subr.bf16.mxu0 0
    %588 = vmatpush1.bf16.msra.mxu0 %v556
    %589 = vmatprep.subr.bf16.mxu0 0
    %590 = vmatpush1.bf16.msra.mxu0 %v555
    %591 = vmatprep.subr.bf16.mxu0 0
    %592 = vmatpush1.bf16.msra.mxu0 %v554
    %593 = vmatprep.subr.bf16.mxu0 0
    %594 = vmatpush1.bf16.msra.mxu0 %v553
    %595 = vmatprep.subr.bf16.mxu0 0
    %596 = vmatpush1.bf16.msra.mxu0 %v552
    %597 = vmatprep.subr.bf16.mxu0 0
    %598 = vmatpush1.bf16.msra.mxu0 %v551
    %599 = vmatprep.subr.bf16.mxu0 0
    %600 = vmatpush2.bf16.msra.mxu0 %v566
    %601 = vmatprep.subr.bf16.mxu0 0
    %602 = vmatpush2.bf16.msra.mxu0 %v565
    %603 = vmatprep.subr.bf16.mxu0 0
    %604 = vmatpush2.bf16.msra.mxu0 %v564
    %605 = vmatprep.subr.bf16.mxu0 0
    %606 = vmatpush2.bf16.msra.mxu0 %v563
    %607 = vmatprep.subr.bf16.mxu0 0
    %608 = vmatpush2.bf16.msra.mxu0 %v562
    %609 = vmatprep.subr.bf16.mxu0 0
    %610 = vmatpush2.bf16.msra.mxu0 %v561
    %611 = vmatprep.subr.bf16.mxu0 0
    %612 = vmatpush2.bf16.msra.mxu0 %v560
    %613 = vmatprep.subr.bf16.mxu0 0
    %614 = vmatpush2.bf16.msra.mxu0 %v559
    %615 = vmatprep.mubr.bf16.mxu0 %v447
    %616 = vmatmul.mubr.bf16.gmra.mxu0 %v446
    %v617 = vpop.f32.mrf.mxu0
    %v618 = vadd.f32 %v485, %v617
    %v619 = vpop.f32.mrf.mxu0
    %v620 = vpop.f32.mrf.mxu0
    %v621 = vadd.f32 %v485, %v620
    %v622 = vpop.f32.mrf.mxu0
    %623 = vdwg.mxu0
    %624 = vst [vmem:[#allocation10] sm:$0xff] %v618
    %625 = vst [vmem:[#allocation10 + $0x8] sm:$0xff] %v621
    // Predicated region
    $region46: #{tpu_custom_call.1} parent=1 // pred_check
      _
    $region47: #{tpu_custom_call.1} parent=1 // pred_check_branch
      %627 = sbr.rel (0) target = $region49
    $region48: #{tpu_custom_call.1} parent=1 // pred_region
      %s629 = ssub.s32 256, 256
      %630 = vsyncadd [#allocation4], %s629
      %s631 = sshll.u32 [#allocation10], 4
      %s632 = int_to_ptr.vmem [resolvable:$true] %s631
      %637 = dma.vmem_to_hbm [thread:$0]  %s632, 256, %s7, [#allocation4], 128, 128, 8
    $region49: #{tpu_custom_call.1} parent=1 // pred_fallthru
      _
    // Predicated region
    $region50: #{tpu_custom_call.1} parent=1 // pred_check
      _
    $region51: #{tpu_custom_call.1} parent=1 // pred_check_branch
      %639 = sbr.rel (0) target = $region53
    $region52: #{tpu_custom_call.1} parent=1 // pred_region
      %640 = dma.done [#allocation4], 256
    $region53: #{tpu_custom_call.1} parent=1 // pred_fallthru
      _
    %641 = vsyncpa [#allocation3], 1
    %642 = vsyncpa [#allocation6], 1
    %643 = vsyncpa [#allocation9], 1
    %644 = vsyncpa [#allocation4], 1

</llo_original>
